<compile_context>
chip_gen: v7x
topology: tpu7x:2x2x1
jax: 0.10.0
libtpu: 0.0.40
codegen_flags: <defaults>
</compile_context>

<pallas_src>
import functools

import jax
import jax.numpy as jnp
from jax import lax
from jax.experimental import pallas as pl
from jax.experimental.pallas import tpu as pltpu


# ---------------------------------------------------------------------------
# Synthetic cfg_model.linear_layer['architecture'] (module name, ctor args),
# mirroring what the PyTorch __init__ eval()s.
# ---------------------------------------------------------------------------
ARCHITECTURE = [
    ("nn.Linear", (32, 64)),
    ("nn.ReLU", ()),
    ("nn.Linear", (64, 64)),
    ("nn.ReLU", ()),
    ("nn.Linear", (64, 1)),
]

_LANE = 128      # lane width (last-dim alignment for multi-tile blocks)
_SUBLANE = 8     # f32 sublane height (feature-dim alignment in the transposed chain)
_TM_MAX = 512    # M-tile cap (per-tile VMEM ~ a few hundred KB; well under limits)


def _round_up(x, m):
    return ((x + m - 1) // m) * m


def _cdiv(a, b):
    return -(-a // b)


# ---------------------------------------------------------------------------
# Fused kernel: the whole MLP for one M-tile.  Activations are kept
# transposed, h_i: (features_i, tm), so the final result is lane-dense along
# the batch axis and stores are unmasked full-lane writes.
# refs = (x_ref, w0, b0, w1, b1, ..., o_ref); relu_flags is static.
# ---------------------------------------------------------------------------
def _fused_mlp_kernel(*refs, relu_flags):
    x_ref, o_ref = refs[0], refs[-1]
    wb = refs[1:-1]

    x = x_ref[...]                          # (tm, K0): rows = batch, cols = features
    h = None                                # (N_i, tm) after each layer
    for li, apply_relu in enumerate(relu_flags):
        w = wb[2 * li][...]                 # (N_i, K_i)  (PyTorch layout, no transpose)
        b = wb[2 * li + 1][...]             # (N_i, 1)    broadcasts across tm lanes
        if li == 0:
            # Contract both operands on their feature (last) dim, q@k.T-style:
            # (N0, K) x (tm, K) -> (N0, tm).
            h = lax.dot_general(w, x, (((1,), (1,)), ((), ())),
                                preferred_element_type=jnp.float32)
        else:
            # Standard matmul: (N_i, K_i) x (K_i, tm) -> (N_i, tm).
            h = lax.dot_general(w, h, (((1,), (0,)), ((), ())),
                                preferred_element_type=jnp.float32)
        h = h + b
        if apply_relu:
            h = jnp.maximum(h, 0.0)
    o_ref[...] = h.astype(o_ref.dtype)


# ---------------------------------------------------------------------------
# Parameter construction (deterministic, mimics nn.Linear shapes & init).
# ---------------------------------------------------------------------------
def init_params(architecture, key):
    params = []
    for module, args in architecture:
        if module == "nn.Linear":
            in_f, out_f = args
            key, kw, kb = jax.random.split(key, 3)
            bound = 1.0 / jnp.sqrt(jnp.float32(in_f))
            w = jax.random.uniform(kw, (out_f, in_f), jnp.float32, -bound, bound)
            b = jax.random.uniform(kb, (out_f,), jnp.float32, -bound, bound)
            params.append({"w": w, "b": b})
        elif module == "nn.ReLU":
            params.append(None)
        else:
            # TODO(synk): only nn.Linear / nn.ReLU layers of the config MLP are modeled.
            raise NotImplementedError(module)
    return params


# ---------------------------------------------------------------------------
# One-time preprocessing (analogue of nn.Module __init__): keep weights in
# PyTorch (out, in) layout, reshape biases to (out, 1), sublane-align feature
# dims (zero padding -> padded features stay exactly 0 through bias + ReLU),
# and fold each trailing ReLU into a per-layer flag.
# ---------------------------------------------------------------------------
def prepare_fused_params(params, architecture):
    wbs = []
    relu_flags = []
    leading_relu = False
    out_dim = None
    prev_out_pad = None          # padded feature count produced by the previous layer
    idx, n = 0, len(architecture)
    while idx < n:
        module, _ = architecture[idx]
        if module == "nn.Linear":
            p = params[idx]
            out_f, in_f = p["w"].shape
            in_pad = prev_out_pad if prev_out_pad is not None else in_f  # x's K stays unpadded
            out_pad = _round_up(out_f, _SUBLANE)
            w = jnp.zeros((out_pad, in_pad), p["w"].dtype).at[:out_f, :in_f].set(p["w"])
            b = jnp.zeros((out_pad, 1), p["b"].dtype).at[:out_f, 0].set(p["b"])
            fuse_relu = (idx + 1 < n) and architecture[idx + 1][0] == "nn.ReLU"
            wbs.append((w, b))
            relu_flags.append(fuse_relu)
            out_dim = out_f
            prev_out_pad = out_pad
            idx += 2 if fuse_relu else 1
        elif module == "nn.ReLU":
            # Standalone ReLU: leading (applied to the input in the wrapper) or
            # following an already-fused ReLU (idempotent).
            if relu_flags:
                relu_flags[-1] = True
            else:
                leading_relu = True
            idx += 1
        else:
            raise NotImplementedError(module)
    assert wbs, "architecture must contain at least one nn.Linear"
    return wbs, tuple(relu_flags), out_dim, leading_relu


# ---------------------------------------------------------------------------
# Batch-axis tiling (the batch axis is the LANE axis of the kernel output).
# ---------------------------------------------------------------------------
def _choose_m_tiling(M):
    if M > _TM_MAX:
        n_tiles = _cdiv(M, _TM_MAX)
        tm = _round_up(_cdiv(M, n_tiles), _LANE)   # multi-tile => lane-aligned tiles
        return tm, tm * n_tiles
    if M >= 2 * _LANE and M % (2 * _LANE) == 0:
        # Moderate, evenly splittable batch: 2 tiles so v7x's second TensorCore
        # gets work (neutral on single-TC v5e/v6e), with zero padding.
        return M // 2, M
    return M, M                                     # single tile, any M, no padding


# ---------------------------------------------------------------------------
# Forward pass: single fused pallas_call over M-tiles.
# ---------------------------------------------------------------------------
def fused_mlp_pallas(x, fused_params):
    wbs, relu_flags, out_dim, leading_relu = fused_params
    if leading_relu:
        x = jnp.maximum(x, 0.0)

    M, K = x.shape
    n_last_pad = wbs[-1][0].shape[0]

    tm, m_pad = _choose_m_tiling(M)
    if m_pad != M:
        # Only the multi-tile tail is padded (< one tile of rows); the feature
        # dim is never padded.
        x = jnp.pad(x, ((0, m_pad - M), (0, 0)))

    in_specs = [pl.BlockSpec((tm, K), lambda i: (i, 0))]
    flat_wb = []
    for w, b in wbs:
        n_i, k_i = w.shape
        in_specs.append(pl.BlockSpec((n_i, k_i), lambda i: (0, 0)))   # VMEM-resident weight
        in_specs.append(pl.BlockSpec((n_i, 1), lambda i: (0, 0)))     # VMEM-resident bias
        flat_wb.extend([w, b])
    out_specs = pl.BlockSpec((n_last_pad, tm), lambda i: (0, i))

    # Honest advisory cost for XLA scheduling around the custom call.
    itemsize = x.dtype.itemsize
    flops = sum(2 * M * w.shape[0] * w.shape[1] for w, _ in wbs)
    bytes_accessed = (M * K + M * n_last_pad
                      + sum(w.size + b.size for w, b in wbs)) * itemsize

    kernel = functools.partial(_fused_mlp_kernel, relu_flags=relu_flags)
    out_t = pl.pallas_call(
        kernel,
        out_shape=jax.ShapeDtypeStruct((n_last_pad, m_pad), x.dtype),
        grid=(m_pad // tm,),
        in_specs=in_specs,
        out_specs=out_specs,
        compiler_params=pltpu.CompilerParams(
            # M-tiles are independent: "parallel" shards them across v7x's 2 TCs
            # (neutral on single-TC v5e/v6e).
            dimension_semantics=("parallel",),
        ),
        cost_estimate=pl.CostEstimate(
            flops=flops, transcendentals=0, bytes_accessed=bytes_accessed),
    )(x, *flat_wb)

    # (n_last_pad, m_pad) -> (M, out_dim); tiny, lane-dense array.
    return out_t[:out_dim, :M].T


def linear_layer_forward(x, fused_params):
    return fused_mlp_pallas(x, fused_params)


# ---------------------------------------------------------------------------
# Pure-JAX reference (matches the PyTorch forward exactly).
# ---------------------------------------------------------------------------
def reference_forward(params, architecture, x):
    for (module, _), p in zip(architecture, params):
        if module == "nn.Linear":
            x = x @ p["w"].T + p["b"]
        elif module == "nn.ReLU":
            x = jnp.maximum(x, 0.0)
    return x


if __name__ == "__main__":
    key = jax.random.PRNGKey(0)
    k_in, k_params = jax.random.split(key)

    batch = 8
    in_features = ARCHITECTURE[0][1][0]          # 32
    x = jax.random.normal(k_in, (batch, in_features), jnp.float32)

    params = init_params(ARCHITECTURE, k_params)
    # One-time weight/bias packing (analogue of module __init__).
    fused_params = prepare_fused_params(params, ARCHITECTURE)

    out = linear_layer_forward(x, fused_params)
    out = jax.block_until_ready(out)

    ref = reference_forward(params, ARCHITECTURE, x)
    assert out.shape == ref.shape == (batch, ARCHITECTURE[-1][1][1])
    assert jnp.allclose(out, ref, atol=1e-5, rtol=1e-5), "mismatch vs reference"

    print("KERNEL_OK")
</pallas_src>

<mosaic_0001>
module attributes {stable_mosaic.version = 11 : i64} {
  func.func @_fused_mlp_kernel(%arg0: i32, %arg1: memref<8x32xf32, #tpu.memory_space<vmem>>, %arg2: memref<64x32xf32, #tpu.memory_space<vmem>>, %arg3: memref<64x1xf32, #tpu.memory_space<vmem>>, %arg4: memref<64x64xf32, #tpu.memory_space<vmem>>, %arg5: memref<64x1xf32, #tpu.memory_space<vmem>>, %arg6: memref<8x64xf32, #tpu.memory_space<vmem>>, %arg7: memref<8x1xf32, #tpu.memory_space<vmem>>, %arg8: memref<8x8xf32, #tpu.memory_space<vmem>>) attributes {dimension_semantics = [#tpu.dimension_semantics<parallel>], iteration_bounds = array<i64: 1>, scalar_prefetch = 0 : i64, scratch_operands = 0 : i64, tpu.core_type = #tpu.core_type<tc>, window_params = [{transform_indices = @transform_0, window_bounds = array<i64: 8, 32>}, {pipeline_mode = #tpu.pipeline_mode<synchronous>, transform_indices = @transform_1, window_bounds = array<i64: 64, 32>}, {pipeline_mode = #tpu.pipeline_mode<synchronous>, transform_indices = @transform_2, window_bounds = array<i64: 64, 1>}, {pipeline_mode = #tpu.pipeline_mode<synchronous>, transform_indices = @transform_3, window_bounds = array<i64: 64, 64>}, {pipeline_mode = #tpu.pipeline_mode<synchronous>, transform_indices = @transform_4, window_bounds = array<i64: 64, 1>}, {pipeline_mode = #tpu.pipeline_mode<synchronous>, transform_indices = @transform_5, window_bounds = array<i64: 8, 64>}, {pipeline_mode = #tpu.pipeline_mode<synchronous>, transform_indices = @transform_6, window_bounds = array<i64: 8, 1>}, {transform_indices = @transform_7, window_bounds = array<i64: 8, 8>}]} {
    %c0 = arith.constant 0 : index
    %c0_0 = arith.constant 0 : index
    %0 = vector.load %arg1[%c0, %c0_0] : memref<8x32xf32, #tpu.memory_space<vmem>>, vector<8x32xf32>
    %c0_1 = arith.constant 0 : index
    %c0_2 = arith.constant 0 : index
    %1 = vector.load %arg2[%c0_1, %c0_2] : memref<64x32xf32, #tpu.memory_space<vmem>>, vector<64x32xf32>
    %c0_3 = arith.constant 0 : index
    %c0_4 = arith.constant 0 : index
    %2 = vector.load %arg3[%c0_3, %c0_4] : memref<64x1xf32, #tpu.memory_space<vmem>>, vector<64x1xf32>
    %cst = arith.constant dense<0.000000e+00> : vector<64x8xf32>
    %3 = tpu.matmul %1, %0, %cst {dimension_numbers = #tpu.dot_dimension_numbers<[1], [1], [0], [0], [0, 0, 1, 0], [], []>} : vector<64x32xf32>, vector<8x32xf32>, vector<64x8xf32> -> vector<64x8xf32>
    %4 = vector.broadcast %2 : vector<64x1xf32> to vector<64x8xf32>
    %5 = arith.addf %3, %4 : vector<64x8xf32>
    %cst_5 = arith.constant 0.000000e+00 : f32
    %6 = vector.broadcast %cst_5 : f32 to vector<64x8xf32>
    %7 = arith.maximumf %5, %6 : vector<64x8xf32>
    %c0_6 = arith.constant 0 : index
    %c0_7 = arith.constant 0 : index
    %8 = vector.load %arg4[%c0_6, %c0_7] : memref<64x64xf32, #tpu.memory_space<vmem>>, vector<64x64xf32>
    %c0_8 = arith.constant 0 : index
    %c0_9 = arith.constant 0 : index
    %9 = vector.load %arg5[%c0_8, %c0_9] : memref<64x1xf32, #tpu.memory_space<vmem>>, vector<64x1xf32>
    %cst_10 = arith.constant dense<0.000000e+00> : vector<64x8xf32>
    %10 = tpu.matmul %8, %7, %cst_10 {dimension_numbers = #tpu.dot_dimension_numbers<[1], [0], [0], [1], [0, 0, 1, 1], [], []>} : vector<64x64xf32>, vector<64x8xf32>, vector<64x8xf32> -> vector<64x8xf32>
    %11 = vector.broadcast %9 : vector<64x1xf32> to vector<64x8xf32>
    %12 = arith.addf %10, %11 : vector<64x8xf32>
    %cst_11 = arith.constant 0.000000e+00 : f32
    %13 = vector.broadcast %cst_11 : f32 to vector<64x8xf32>
    %14 = arith.maximumf %12, %13 : vector<64x8xf32>
    %c0_12 = arith.constant 0 : index
    %c0_13 = arith.constant 0 : index
    %15 = vector.load %arg6[%c0_12, %c0_13] : memref<8x64xf32, #tpu.memory_space<vmem>>, vector<8x64xf32>
    %c0_14 = arith.constant 0 : index
    %c0_15 = arith.constant 0 : index
    %16 = vector.load %arg7[%c0_14, %c0_15] : memref<8x1xf32, #tpu.memory_space<vmem>>, vector<8x1xf32>
    %cst_16 = arith.constant dense<0.000000e+00> : vector<8x8xf32>
    %17 = tpu.matmul %15, %14, %cst_16 {dimension_numbers = #tpu.dot_dimension_numbers<[1], [0], [0], [1], [0, 0, 1, 1], [], []>} : vector<8x64xf32>, vector<64x8xf32>, vector<8x8xf32> -> vector<8x8xf32>
    %18 = vector.broadcast %16 : vector<8x1xf32> to vector<8x8xf32>
    %19 = arith.addf %17, %18 : vector<8x8xf32>
    %c0_17 = arith.constant 0 : index
    %c0_18 = arith.constant 0 : index
    %20 = vector.load %arg8[%c0_17, %c0_18] : memref<8x8xf32, #tpu.memory_space<vmem>>, vector<8x8xf32>
    tpu.vector_store %arg8[%c0_17, %c0_18], %19 {strides = array<i32>} : memref<8x8xf32, #tpu.memory_space<vmem>>, vector<8x8xf32>,
    return
  }
  func.func @transform_0(%arg0: i32) -> (i32, i32) {
    %c0_i32 = arith.constant 0 : i32
    %c0_i32_0 = arith.constant 0 : i32
    return %arg0, %c0_i32 : i32, i32
  }
  func.func @transform_1(%arg0: i32) -> (i32, i32) {
    %c0_i32 = arith.constant 0 : i32
    %c0_i32_0 = arith.constant 0 : i32
    %c0_i32_1 = arith.constant 0 : i32
    return %c0_i32, %c0_i32_0 : i32, i32
  }
  func.func @transform_2(%arg0: i32) -> (i32, i32) {
    %c0_i32 = arith.constant 0 : i32
    %c0_i32_0 = arith.constant 0 : i32
    %c0_i32_1 = arith.constant 0 : i32
    return %c0_i32, %c0_i32_0 : i32, i32
  }
  func.func @transform_3(%arg0: i32) -> (i32, i32) {
    %c0_i32 = arith.constant 0 : i32
    %c0_i32_0 = arith.constant 0 : i32
    %c0_i32_1 = arith.constant 0 : i32
    return %c0_i32, %c0_i32_0 : i32, i32
  }
  func.func @transform_4(%arg0: i32) -> (i32, i32) {
    %c0_i32 = arith.constant 0 : i32
    %c0_i32_0 = arith.constant 0 : i32
    %c0_i32_1 = arith.constant 0 : i32
    return %c0_i32, %c0_i32_0 : i32, i32
  }
  func.func @transform_5(%arg0: i32) -> (i32, i32) {
    %c0_i32 = arith.constant 0 : i32
    %c0_i32_0 = arith.constant 0 : i32
    %c0_i32_1 = arith.constant 0 : i32
    return %c0_i32, %c0_i32_0 : i32, i32
  }
  func.func @transform_6(%arg0: i32) -> (i32, i32) {
    %c0_i32 = arith.constant 0 : i32
    %c0_i32_0 = arith.constant 0 : i32
    %c0_i32_1 = arith.constant 0 : i32
    return %c0_i32, %c0_i32_0 : i32, i32
  }
  func.func @transform_7(%arg0: i32) -> (i32, i32) {
    %c0_i32 = arith.constant 0 : i32
    %c0_i32_0 = arith.constant 0 : i32
    return %c0_i32, %arg0 : i32, i32
  }
}

</mosaic_0001>

<llo_original>
// kernel: tpu_custom_call.1
$region0: #{tpu_custom_call.1}
  #allocation0 [shape = 'u32[]', space=smem, size = 0x4, offset = 0x4, fixed_abs, tag = 'smem constant byte address 0x4 - core index']
  #allocation1 [shape = 'u32[144,128]{1,0:T(1,128)}', space=vmem, size = 0x12000, scoped, tag = 'internal scratch']
  %s0 = inlined_call_operand.vmem [shape: f32[8,32], index: 0, kind: input, shape index: {}]
  %s1 = inlined_call_operand.vmem [shape: f32[64,32], index: 1, kind: input, shape index: {}]
  %s2 = inlined_call_operand.vmem [shape: f32[64,1], index: 2, kind: input, shape index: {}]
  %s3 = inlined_call_operand.vmem [shape: f32[64,64], index: 3, kind: input, shape index: {}]
  %s4 = inlined_call_operand.vmem [shape: f32[64,1], index: 4, kind: input, shape index: {}]
  %s5 = inlined_call_operand.vmem [shape: f32[8,64], index: 5, kind: input, shape index: {}]
  %s6 = inlined_call_operand.vmem [shape: f32[8,1], index: 6, kind: input, shape index: {}]
  %s7 = inlined_call_operand.hbm [shape: f32[8,8], index: 7, kind: output, shape index: {}]
  %s8 = sld [smem:[#allocation0]]
  $region38: #{tpu_custom_call.1} parent=0
    _
  %s10 = ssub.s32 1, %s8
  %s11 = scalar_select 0, %s10, %s8
  $region1: #{tpu_custom_call.1} parent=0
    #allocation2 [shape = 'u8[4096]{0}', space=vmem, size = 0x1000, scoped, tag = 'output window, operand 0, single buffered']
    #allocation3 [shape = 's32[1]{0}', space=sflag, size = 0x4, scoped, tag = 'scoped memory for tpu_custom_call.1']
    %12 = vsyncpa [#allocation3], 0
    // Predicated region
    $region2: #{tpu_custom_call.1} parent=1 // pred_check
      _
    $region3: #{tpu_custom_call.1} parent=1 // pred_check_branch
      %14 = sbr.rel (0) target = $region5
    $region4: #{tpu_custom_call.1} parent=1 // pred_region
      _
    $region5: #{tpu_custom_call.1} parent=1 // pred_fallthru
      _
    // Predicated region
    $region6: #{tpu_custom_call.1} parent=1 // pred_check
      _
    $region7: #{tpu_custom_call.1} parent=1 // pred_check_branch
      %16 = sbr.rel (0) target = $region9
    $region8: #{tpu_custom_call.1} parent=1 // pred_region
      _
    $region9: #{tpu_custom_call.1} parent=1 // pred_fallthru
      _
    // Predicated region
    $region10: #{tpu_custom_call.1} parent=1 // pred_check
      _
    $region11: #{tpu_custom_call.1} parent=1 // pred_check_branch
      %18 = sbr.rel (0) target = $region13
    $region12: #{tpu_custom_call.1} parent=1 // pred_region
      _
    $region13: #{tpu_custom_call.1} parent=1 // pred_fallthru
      _
    // Predicated region
    $region14: #{tpu_custom_call.1} parent=1 // pred_check
      _
    $region15: #{tpu_custom_call.1} parent=1 // pred_check_branch
      %20 = sbr.rel (0) target = $region17
    $region16: #{tpu_custom_call.1} parent=1 // pred_region
      _
    $region17: #{tpu_custom_call.1} parent=1 // pred_fallthru
      _
    // Predicated region
    $region18: #{tpu_custom_call.1} parent=1 // pred_check
      _
    $region19: #{tpu_custom_call.1} parent=1 // pred_check_branch
      %22 = sbr.rel (0) target = $region21
    $region20: #{tpu_custom_call.1} parent=1 // pred_region
      _
    $region21: #{tpu_custom_call.1} parent=1 // pred_fallthru
      _
    // Predicated region
    $region22: #{tpu_custom_call.1} parent=1 // pred_check
      _
    $region23: #{tpu_custom_call.1} parent=1 // pred_check_branch
      %24 = sbr.rel (0) target = $region25
    $region24: #{tpu_custom_call.1} parent=1 // pred_region
      _
    $region25: #{tpu_custom_call.1} parent=1 // pred_fallthru
      _
    // Predicated region
    $region26: #{tpu_custom_call.1} parent=1 // pred_check
      _
    $region27: #{tpu_custom_call.1} parent=1 // pred_check_branch
      %26 = sbr.rel (0) target = $region29
    $region28: #{tpu_custom_call.1} parent=1 // pred_region
      _
    $region29: #{tpu_custom_call.1} parent=1 // pred_fallthru
      _
    %v27 = vld [vmem:[%s0] sm:$0xff]
    %v28 = vld [vmem:[%s1] sm:$0xff]
    %v29 = vld [vmem:[%s1 + $0x8] sm:$0xff]
    %v30 = vld [vmem:[%s1 + $0x10] sm:$0xff]
    %v31 = vld [vmem:[%s1 + $0x18] sm:$0xff]
    %v32 = vld [vmem:[%s1 + $0x20] sm:$0xff]
    %v33 = vld [vmem:[%s1 + $0x28] sm:$0xff]
    %v34 = vld [vmem:[%s1 + $0x30] sm:$0xff]
    %v35 = vld [vmem:[%s1 + $0x38] sm:$0xff]
    %v36 = vld [vmem:[%s2] sm:$0xff]
    %v37 = vld [vmem:[%s2 + $0x8] sm:$0xff]
    %v38 = vld [vmem:[%s2 + $0x10] sm:$0xff]
    %v39 = vld [vmem:[%s2 + $0x18] sm:$0xff]
    %v40 = vld [vmem:[%s2 + $0x20] sm:$0xff]
    %v41 = vld [vmem:[%s2 + $0x28] sm:$0xff]
    %v42 = vld [vmem:[%s2 + $0x30] sm:$0xff]
    %v43 = vld [vmem:[%s2 + $0x38] sm:$0xff]
    %45 = vset.pattern.permute.xlu0 0
    %46 = vperm.xlu0 %45, %v36
    %v47 = vpop.permute.xlu0 %46
    %50 = vset.pattern.permute.xlu0 0
    %51 = vperm.xlu0 %50, %v37
    %v52 = vpop.permute.xlu0 %51
    %55 = vset.pattern.permute.xlu0 0
    %56 = vperm.xlu0 %55, %v38
    %v57 = vpop.permute.xlu0 %56
    %60 = vset.pattern.permute.xlu0 0
    %61 = vperm.xlu0 %60, %v39
    %v62 = vpop.permute.xlu0 %61
    %65 = vset.pattern.permute.xlu0 0
    %66 = vperm.xlu0 %65, %v40
    %v67 = vpop.permute.xlu0 %66
    %70 = vset.pattern.permute.xlu0 0
    %71 = vperm.xlu0 %70, %v41
    %v72 = vpop.permute.xlu0 %71
    %75 = vset.pattern.permute.xlu0 0
    %76 = vperm.xlu0 %75, %v42
    %v77 = vpop.permute.xlu0 %76
    %80 = vset.pattern.permute.xlu0 0
    %81 = vperm.xlu0 %80, %v43
    %v82 = vpop.permute.xlu0 %81
    %vm84 = vcmask 261120
    %v86 = vsel %vm84, %v28, 0
    %v89 = vsel %vm84, %v29, 0
    %v92 = vsel %vm84, %v30, 0
    %v95 = vsel %vm84, %v31, 0
    %v98 = vsel %vm84, %v32, 0
    %v101 = vsel %vm84, %v33, 0
    %v104 = vsel %vm84, %v34, 0
    %v107 = vsel %vm84, %v35, 0
    %v110 = vsel %vm84, %v27, 0
    %112 = vmatprep.subr.mxu0 0.0
    %113 = vmatpush1.xpose.msra.mxu0 %v110
    %114 = vmatprep.subr.mxu0 0.0
    %115 = vmatpush1.xpose.msra.mxu0 0.0
    %116 = vmatprep.subr.mxu0 0.0
    %117 = vmatpush1.xpose.msra.mxu0 0.0
    %118 = vmatprep.subr.mxu0 0.0
    %119 = vmatpush1.xpose.msra.mxu0 0.0
    %120 = vmatprep.subr.mxu0 0.0
    %121 = vmatpush1.xpose.msra.mxu0 0.0
    %122 = vmatprep.subr.mxu0 0.0
    %123 = vmatpush1.xpose.msra.mxu0 0.0
    %124 = vmatprep.subr.mxu0 0.0
    %125 = vmatpush1.xpose.msra.mxu0 0.0
    %126 = vmatprep.subr.mxu0 0.0
    %127 = vmatpush1.xpose.msra.mxu0 0.0
    %128 = vmatprep.subr.mxu0 0.0
    %129 = vmatpush1.xpose.msra.mxu0 0.0
    %130 = vmatprep.subr.mxu0 0.0
    %131 = vmatpush1.xpose.msra.mxu0 0.0
    %132 = vmatprep.subr.mxu0 0.0
    %133 = vmatpush1.xpose.msra.mxu0 0.0
    %134 = vmatprep.subr.mxu0 0.0
    %135 = vmatpush1.xpose.msra.mxu0 0.0
    %136 = vmatprep.subr.mxu0 0.0
    %137 = vmatpush1.xpose.msra.mxu0 0.0
    %138 = vmatprep.subr.mxu0 0.0
    %139 = vmatpush1.xpose.msra.mxu0 0.0
    %140 = vmatprep.subr.mxu0 0.0
    %141 = vmatpush1.xpose.msra.mxu0 0.0
    %142 = vmatprep.subr.mxu0 0.0
    %143 = vmatpush1.xpose.msra.mxu0 0.0
    %144 = vmatprep.subr.mxu0 0.0
    %145 = vmatpush1.xpose.msra.mxu0 0.0
    %146 = vmatprep.subr.mxu0 0.0
    %147 = vmatpush1.xpose.msra.mxu0 0.0
    %148 = vmatprep.subr.mxu0 0.0
    %149 = vmatpush1.xpose.msra.mxu0 0.0
    %150 = vmatprep.subr.mxu0 0.0
    %151 = vmatpush1.xpose.msra.mxu0 0.0
    %152 = vmatprep.subr.mxu0 0.0
    %153 = vmatpush1.xpose.msra.mxu0 0.0
    %154 = vmatprep.subr.mxu0 0.0
    %155 = vmatpush1.xpose.msra.mxu0 0.0
    %156 = vmatprep.subr.mxu0 0.0
    %157 = vmatpush1.xpose.msra.mxu0 0.0
    %158 = vmatprep.subr.mxu0 0.0
    %159 = vmatpush1.xpose.msra.mxu0 0.0
    %160 = vmatprep.subr.mxu0 0.0
    %161 = vmatpush1.xpose.msra.mxu0 0.0
    %162 = vmatprep.subr.mxu0 0.0
    %163 = vmatpush1.xpose.msra.mxu0 0.0
    %164 = vmatprep.subr.mxu0 0.0
    %165 = vmatpush1.xpose.msra.mxu0 0.0
    %166 = vmatprep.subr.mxu0 0.0
    %167 = vmatpush1.xpose.msra.mxu0 0.0
    %168 = vmatprep.subr.mxu0 0.0
    %169 = vmatpush1.xpose.msra.mxu0 0.0
    %170 = vmatprep.subr.mxu0 0.0
    %171 = vmatpush1.xpose.msra.mxu0 0.0
    %172 = vmatprep.subr.mxu0 0.0
    %173 = vmatpush1.xpose.msra.mxu0 0.0
    %174 = vmatprep.subr.mxu0 0.0
    %175 = vmatpush1.xpose.msra.mxu0 0.0
    %176 = vmatprep.mubr.f32.mxu0 0.0
    %177 = vmatmul.mubr.f32.gmra.mrb[0].mxu0 %v86
    %v178 = vpop.f32.mrb[0].mxu0
    %v179 = vadd.f32 %v47, %v178
    %v180 = vpop.f32.mrb[0].mxu0
    %181 = vmatprep.mubr.f32.mxu0 0.0
    %182 = vmatmul.mubr.f32.gmra.mrb[0].mxu0 %v89
    %v183 = vpop.f32.mrb[0].mxu0
    %v184 = vadd.f32 %v52, %v183
    %v185 = vpop.f32.mrb[0].mxu0
    %186 = vmatprep.mubr.f32.mxu0 0.0
    %187 = vmatmul.mubr.f32.gmra.mrb[0].mxu0 %v92
    %v188 = vpop.f32.mrb[0].mxu0
    %v189 = vadd.f32 %v57, %v188
    %v190 = vpop.f32.mrb[0].mxu0
    %191 = vmatprep.mubr.f32.mxu0 0.0
    %192 = vmatmul.mubr.f32.gmra.mrb[0].mxu0 %v95
    %v193 = vpop.f32.mrb[0].mxu0
    %v194 = vadd.f32 %v62, %v193
    %v195 = vpop.f32.mrb[0].mxu0
    %196 = vmatprep.mubr.f32.mxu0 0.0
    %197 = vmatmul.mubr.f32.gmra.mrb[0].mxu0 %v98
    %v198 = vpop.f32.mrb[0].mxu0
    %v199 = vadd.f32 %v67, %v198
    %v200 = vpop.f32.mrb[0].mxu0
    %201 = vmatprep.mubr.f32.mxu0 0.0
    %202 = vmatmul.mubr.f32.gmra.mrb[0].mxu0 %v101
    %v203 = vpop.f32.mrb[0].mxu0
    %v204 = vadd.f32 %v72, %v203
    %v205 = vpop.f32.mrb[0].mxu0
    %206 = vmatprep.mubr.f32.mxu0 0.0
    %207 = vmatmul.mubr.f32.gmra.mrb[0].mxu0 %v104
    %v208 = vpop.f32.mrb[0].mxu0
    %v209 = vadd.f32 %v77, %v208
    %v210 = vpop.f32.mrb[0].mxu0
    %211 = vmatprep.mubr.f32.mxu0 0.0
    %212 = vmatmul.mubr.f32.gmra.mrb[0].mxu0 %v107
    %v213 = vpop.f32.mrb[0].mxu0
    %v214 = vadd.f32 %v82, %v213
    %v215 = vpop.f32.mrb[0].mxu0
    %216 = vdwg.mxu0
    %v217 = vmax.f32 %v179, 0.0
    %v218 = vmax.f32 %v184, 0.0
    %v219 = vmax.f32 %v189, 0.0
    %v220 = vmax.f32 %v194, 0.0
    %v221 = vmax.f32 %v199, 0.0
    %v222 = vmax.f32 %v204, 0.0
    %v223 = vmax.f32 %v209, 0.0
    %v224 = vmax.f32 %v214, 0.0
    %v225 = vld [vmem:[%s3] sm:$0xff]
    %v226 = vld [vmem:[%s3 + $0x8] sm:$0xff]
    %v227 = vld [vmem:[%s3 + $0x10] sm:$0xff]
    %v228 = vld [vmem:[%s3 + $0x18] sm:$0xff]
    %v229 = vld [vmem:[%s3 + $0x20] sm:$0xff]
    %v230 = vld [vmem:[%s3 + $0x28] sm:$0xff]
    %v231 = vld [vmem:[%s3 + $0x30] sm:$0xff]
    %v232 = vld [vmem:[%s3 + $0x38] sm:$0xff]
    %v233 = vld [vmem:[%s4] sm:$0xff]
    %v234 = vld [vmem:[%s4 + $0x8] sm:$0xff]
    %v235 = vld [vmem:[%s4 + $0x10] sm:$0xff]
    %v236 = vld [vmem:[%s4 + $0x18] sm:$0xff]
    %v237 = vld [vmem:[%s4 + $0x20] sm:$0xff]
    %v238 = vld [vmem:[%s4 + $0x28] sm:$0xff]
    %v239 = vld [vmem:[%s4 + $0x30] sm:$0xff]
    %v240 = vld [vmem:[%s4 + $0x38] sm:$0xff]
    %242 = vset.pattern.permute.xlu0 0
    %243 = vperm.xlu0 %242, %v233
    %v244 = vpop.permute.xlu0 %243
    %247 = vset.pattern.permute.xlu0 0
    %248 = vperm.xlu0 %247, %v234
    %v249 = vpop.permute.xlu0 %248
    %252 = vset.pattern.permute.xlu0 0
    %253 = vperm.xlu0 %252, %v235
    %v254 = vpop.permute.xlu0 %253
    %257 = vset.pattern.permute.xlu0 0
    %258 = vperm.xlu0 %257, %v236
    %v259 = vpop.permute.xlu0 %258
    %262 = vset.pattern.permute.xlu0 0
    %263 = vperm.xlu0 %262, %v237
    %v264 = vpop.permute.xlu0 %263
    %267 = vset.pattern.permute.xlu0 0
    %268 = vperm.xlu0 %267, %v238
    %v269 = vpop.permute.xlu0 %268
    %272 = vset.pattern.permute.xlu0 0
    %273 = vperm.xlu0 %272, %v239
    %v274 = vpop.permute.xlu0 %273
    %277 = vset.pattern.permute.xlu0 0
    %278 = vperm.xlu0 %277, %v240
    %v279 = vpop.permute.xlu0 %278
    %vm281 = vcmask 523264
    %v283 = vsel %vm281, %v225, 0
    %v286 = vsel %vm281, %v226, 0
    %v289 = vsel %vm281, %v227, 0
    %v292 = vsel %vm281, %v228, 0
    %v295 = vsel %vm281, %v229, 0
    %v298 = vsel %vm281, %v230, 0
    %v301 = vsel %vm281, %v231, 0
    %v304 = vsel %vm281, %v232, 0
    %306 = vmatprep.subr.mxu0 0.0
    %307 = vmatpush1.msra.mxu0 %v217
    %308 = vmatprep.subr.mxu0 0.0
    %309 = vmatpush1.msra.mxu0 %v218
    %310 = vmatprep.subr.mxu0 0.0
    %311 = vmatpush1.msra.mxu0 %v219
    %312 = vmatprep.subr.mxu0 0.0
    %313 = vmatpush1.msra.mxu0 %v220
    %314 = vmatprep.subr.mxu0 0.0
    %315 = vmatpush1.msra.mxu0 %v221
    %316 = vmatprep.subr.mxu0 0.0
    %317 = vmatpush1.msra.mxu0 %v222
    %318 = vmatprep.subr.mxu0 0.0
    %319 = vmatpush1.msra.mxu0 %v223
    %320 = vmatprep.subr.mxu0 0.0
    %321 = vmatpush1.msra.mxu0 %v224
    %322 = vmatprep.subr.mxu0 0.0
    %323 = vmatpush1.msra.mxu0 0.0
    %324 = vmatprep.subr.mxu0 0.0
    %325 = vmatpush1.msra.mxu0 0.0
    %326 = vmatprep.subr.mxu0 0.0
    %327 = vmatpush1.msra.mxu0 0.0
    %328 = vmatprep.subr.mxu0 0.0
    %329 = vmatpush1.msra.mxu0 0.0
    %330 = vmatprep.subr.mxu0 0.0
    %331 = vmatpush1.msra.mxu0 0.0
    %332 = vmatprep.subr.mxu0 0.0
    %333 = vmatpush1.msra.mxu0 0.0
    %334 = vmatprep.subr.mxu0 0.0
    %335 = vmatpush1.msra.mxu0 0.0
    %336 = vmatprep.subr.mxu0 0.0
    %337 = vmatpush1.msra.mxu0 0.0
    %338 = vmatprep.subr.mxu0 0.0
    %339 = vmatpush1.msra.mxu0 0.0
    %340 = vmatprep.subr.mxu0 0.0
    %341 = vmatpush1.msra.mxu0 0.0
    %342 = vmatprep.subr.mxu0 0.0
    %343 = vmatpush1.msra.mxu0 0.0
    %344 = vmatprep.subr.mxu0 0.0
    %345 = vmatpush1.msra.mxu0 0.0
    %346 = vmatprep.subr.mxu0 0.0
    %347 = vmatpush1.msra.mxu0 0.0
    %348 = vmatprep.subr.mxu0 0.0
    %349 = vmatpush1.msra.mxu0 0.0
    %350 = vmatprep.subr.mxu0 0.0
    %351 = vmatpush1.msra.mxu0 0.0
    %352 = vmatprep.subr.mxu0 0.0
    %353 = vmatpush1.msra.mxu0 0.0
    %354 = vmatprep.subr.mxu0 0.0
    %355 = vmatpush1.msra.mxu0 0.0
    %356 = vmatprep.subr.mxu0 0.0
    %357 = vmatpush1.msra.mxu0 0.0
    %358 = vmatprep.subr.mxu0 0.0
    %359 = vmatpush1.msra.mxu0 0.0
    %360 = vmatprep.subr.mxu0 0.0
    %361 = vmatpush1.msra.mxu0 0.0
    %362 = vmatprep.subr.mxu0 0.0
    %363 = vmatpush1.msra.mxu0 0.0
    %364 = vmatprep.subr.mxu0 0.0
    %365 = vmatpush1.msra.mxu0 0.0
    %366 = vmatprep.subr.mxu0 0.0
    %367 = vmatpush1.msra.mxu0 0.0
    %368 = vmatprep.subr.mxu0 0.0
    %369 = vmatpush1.msra.mxu0 0.0
    %370 = vmatprep.mubr.f32.mxu0 0.0
    %371 = vmatmul.mubr.f32.gmra.mrb[0].mxu0 %v283
    %v372 = vpop.f32.mrb[0].mxu0
    %v373 = vadd.f32 %v244, %v372
    %v374 = vpop.f32.mrb[0].mxu0
    %375 = vmatprep.mubr.f32.mxu0 0.0
    %376 = vmatmul.mubr.f32.gmra.mrb[0].mxu0 %v286
    %v377 = vpop.f32.mrb[0].mxu0
    %v378 = vadd.f32 %v249, %v377
    %v379 = vpop.f32.mrb[0].mxu0
    %380 = vmatprep.mubr.f32.mxu0 0.0
    %381 = vmatmul.mubr.f32.gmra.mrb[0].mxu0 %v289
    %v382 = vpop.f32.mrb[0].mxu0
    %v383 = vadd.f32 %v254, %v382
    %v384 = vpop.f32.mrb[0].mxu0
    %385 = vmatprep.mubr.f32.mxu0 0.0
    %386 = vmatmul.mubr.f32.gmra.mrb[0].mxu0 %v292
    %v387 = vpop.f32.mrb[0].mxu0
    %v388 = vadd.f32 %v259, %v387
    %v389 = vpop.f32.mrb[0].mxu0
    %390 = vmatprep.mubr.f32.mxu0 0.0
    %391 = vmatmul.mubr.f32.gmra.mrb[0].mxu0 %v295
    %v392 = vpop.f32.mrb[0].mxu0
    %v393 = vadd.f32 %v264, %v392
    %v394 = vpop.f32.mrb[0].mxu0
    %395 = vmatprep.mubr.f32.mxu0 0.0
    %396 = vmatmul.mubr.f32.gmra.mrb[0].mxu0 %v298
    %v397 = vpop.f32.mrb[0].mxu0
    %v398 = vadd.f32 %v269, %v397
    %v399 = vpop.f32.mrb[0].mxu0
    %400 = vmatprep.mubr.f32.mxu0 0.0
    %401 = vmatmul.mubr.f32.gmra.mrb[0].mxu0 %v301
    %v402 = vpop.f32.mrb[0].mxu0
    %v403 = vadd.f32 %v274, %v402
    %v404 = vpop.f32.mrb[0].mxu0
    %405 = vmatprep.mubr.f32.mxu0 0.0
    %406 = vmatmul.mubr.f32.gmra.mrb[0].mxu0 %v304
    %v407 = vpop.f32.mrb[0].mxu0
    %v408 = vadd.f32 %v279, %v407
    %v409 = vpop.f32.mrb[0].mxu0
    %410 = vdwg.mxu0
    %v411 = vmax.f32 %v373, 0.0
    %v412 = vmax.f32 %v378, 0.0
    %v413 = vmax.f32 %v383, 0.0
    %v414 = vmax.f32 %v388, 0.0
    %v415 = vmax.f32 %v393, 0.0
    %v416 = vmax.f32 %v398, 0.0
    %v417 = vmax.f32 %v403, 0.0
    %v418 = vmax.f32 %v408, 0.0
    %v419 = vld [vmem:[%s5] sm:$0xff]
    %v420 = vld [vmem:[%s6] sm:$0xff]
    %422 = vset.pattern.permute.xlu0 0
    %423 = vperm.xlu0 %422, %v420
    %v424 = vpop.permute.xlu0 %423
    %v427 = vsel %vm281, %v419, 0
    %429 = vmatprep.subr.mxu0 0.0
    %430 = vmatpush1.msra.mxu0 %v411
    %431 = vmatprep.subr.mxu0 0.0
    %432 = vmatpush1.msra.mxu0 %v412
    %433 = vmatprep.subr.mxu0 0.0
    %434 = vmatpush1.msra.mxu0 %v413
    %435 = vmatprep.subr.mxu0 0.0
    %436 = vmatpush1.msra.mxu0 %v414
    %437 = vmatprep.subr.mxu0 0.0
    %438 = vmatpush1.msra.mxu0 %v415
    %439 = vmatprep.subr.mxu0 0.0
    %440 = vmatpush1.msra.mxu0 %v416
    %441 = vmatprep.subr.mxu0 0.0
    %442 = vmatpush1.msra.mxu0 %v417
    %443 = vmatprep.subr.mxu0 0.0
    %444 = vmatpush1.msra.mxu0 %v418
    %445 = vmatprep.subr.mxu0 0.0
    %446 = vmatpush1.msra.mxu0 0.0
    %447 = vmatprep.subr.mxu0 0.0
    %448 = vmatpush1.msra.mxu0 0.0
    %449 = vmatprep.subr.mxu0 0.0
    %450 = vmatpush1.msra.mxu0 0.0
    %451 = vmatprep.subr.mxu0 0.0
    %452 = vmatpush1.msra.mxu0 0.0
    %453 = vmatprep.subr.mxu0 0.0
    %454 = vmatpush1.msra.mxu0 0.0
    %455 = vmatprep.subr.mxu0 0.0
    %456 = vmatpush1.msra.mxu0 0.0
    %457 = vmatprep.subr.mxu0 0.0
    %458 = vmatpush1.msra.mxu0 0.0
    %459 = vmatprep.subr.mxu0 0.0
    %460 = vmatpush1.msra.mxu0 0.0
    %461 = vmatprep.subr.mxu0 0.0
    %462 = vmatpush1.msra.mxu0 0.0
    %463 = vmatprep.subr.mxu0 0.0
    %464 = vmatpush1.msra.mxu0 0.0
    %465 = vmatprep.subr.mxu0 0.0
    %466 = vmatpush1.msra.mxu0 0.0
    %467 = vmatprep.subr.mxu0 0.0
    %468 = vmatpush1.msra.mxu0 0.0
    %469 = vmatprep.subr.mxu0 0.0
    %470 = vmatpush1.msra.mxu0 0.0
    %471 = vmatprep.subr.mxu0 0.0
    %472 = vmatpush1.msra.mxu0 0.0
    %473 = vmatprep.subr.mxu0 0.0
    %474 = vmatpush1.msra.mxu0 0.0
    %475 = vmatprep.subr.mxu0 0.0
    %476 = vmatpush1.msra.mxu0 0.0
    %477 = vmatprep.subr.mxu0 0.0
    %478 = vmatpush1.msra.mxu0 0.0
    %479 = vmatprep.subr.mxu0 0.0
    %480 = vmatpush1.msra.mxu0 0.0
    %481 = vmatprep.subr.mxu0 0.0
    %482 = vmatpush1.msra.mxu0 0.0
    %483 = vmatprep.subr.mxu0 0.0
    %484 = vmatpush1.msra.mxu0 0.0
    %485 = vmatprep.subr.mxu0 0.0
    %486 = vmatpush1.msra.mxu0 0.0
    %487 = vmatprep.subr.mxu0 0.0
    %488 = vmatpush1.msra.mxu0 0.0
    %489 = vmatprep.subr.mxu0 0.0
    %490 = vmatpush1.msra.mxu0 0.0
    %491 = vmatprep.subr.mxu0 0.0
    %492 = vmatpush1.msra.mxu0 0.0
    %493 = vmatprep.mubr.f32.mxu0 0.0
    %494 = vmatmul.mubr.f32.gmra.mrb[0].mxu0 %v427
    %v495 = vpop.f32.mrb[0].mxu0
    %v496 = vadd.f32 %v424, %v495
    %v497 = vpop.f32.mrb[0].mxu0
    %498 = vdwg.mxu0
    %vm499 = vcmask 64512
    %500 = vst.msk [vmem:[#allocation2] sm:$0xff] %vm499, %v496
    // Predicated region
    $region30: #{tpu_custom_call.1} parent=1 // pred_check
      _
    $region31: #{tpu_custom_call.1} parent=1 // pred_check_branch
      %502 = sbr.rel (0) target = $region33
    $region32: #{tpu_custom_call.1} parent=1 // pred_region
      %s504 = ssub.s32 128, 128
      %505 = vsyncadd [#allocation3], %s504
      %s507 = sshll.u32 [#allocation2], 4
      %s508 = int_to_ptr.vmem [resolvable:$true] %s507
      %510 = dma.vmem_to_hbm [thread:$0]  %s508, 128, %s7, [#allocation3]
    $region33: #{tpu_custom_call.1} parent=1 // pred_fallthru
      _
    // Predicated region
    $region34: #{tpu_custom_call.1} parent=1 // pred_check
      _
    $region35: #{tpu_custom_call.1} parent=1 // pred_check_branch
      %512 = sbr.rel (0) target = $region37
    $region36: #{tpu_custom_call.1} parent=1 // pred_region
      %513 = dma.done [#allocation3], 128
    $region37: #{tpu_custom_call.1} parent=1 // pred_fallthru
      _
    %514 = vsyncpa [#allocation3], 1

</llo_original>
